<compile_context>
chip_gen: v6e
topology: v6e:2x2x1
jax: 0.10.0
libtpu: 0.0.40
codegen_flags: <defaults>
</compile_context>

<pallas_src>
import jax
import jax.numpy as jnp
from jax.experimental import pallas as pl
from jax.experimental.pallas import tpu as pltpu


def svd_kernel(u_idx_ref, v_idx_ref,        # scalar-prefetch index vectors (SMEM)
               mean_ref,                    # (1,) f32 in SMEM
               u_row_ref, i_row_ref,        # (1, 1, E) gathered embedding rows
               ub_ref, ib_ref,              # (1, 1, 1) gathered biases
               out_ref):                    # (1, 1, 1) per-sample output
    del u_idx_ref, v_idx_ref                # only consumed by the index_maps
    dot = jnp.sum(u_row_ref[...] * i_row_ref[...], axis=-1, keepdims=True)
    out_ref[...] = dot + ub_ref[...] + ib_ref[...] + mean_ref[0]


def svd_forward(u, v, user_emb, user_bias, item_emb, item_bias, mean):
    """Pallas-backed equivalent of SVD.forward(u, v). Returns shape (B,)."""
    B = u.shape[0]
    n_users, E = user_emb.shape
    n_items, _ = item_emb.shape

    u_idx = u.astype(jnp.int32)
    v_idx = v.astype(jnp.int32)
    mean_arr = jnp.asarray(mean, jnp.float32).reshape(1)

    # 3-D views so each gathered block's last two dims equal the full array dims.
    user_tab = user_emb.reshape(n_users, 1, E)
    item_tab = item_emb.reshape(n_items, 1, E)
    user_b = user_bias.reshape(n_users, 1, 1)
    item_b = item_bias.reshape(n_items, 1, 1)

    grid_spec = pltpu.PrefetchScalarGridSpec(
        num_scalar_prefetch=2,               # u_idx, v_idx -> SMEM
        grid=(B,),                           # one sample per grid step
        in_specs=[
            pl.BlockSpec(memory_space=pltpu.MemorySpace.SMEM),              # mean
            pl.BlockSpec((1, 1, E), lambda i, u_r, v_r: (u_r[i], 0, 0)),    # user row
            pl.BlockSpec((1, 1, E), lambda i, u_r, v_r: (v_r[i], 0, 0)),    # item row
            pl.BlockSpec((1, 1, 1), lambda i, u_r, v_r: (u_r[i], 0, 0)),    # user bias
            pl.BlockSpec((1, 1, 1), lambda i, u_r, v_r: (v_r[i], 0, 0)),    # item bias
        ],
        out_specs=pl.BlockSpec((1, 1, 1), lambda i, u_r, v_r: (i, 0, 0)),
    )

    out = pl.pallas_call(
        svd_kernel,
        out_shape=jax.ShapeDtypeStruct((B, 1, 1), jnp.float32),
        grid_spec=grid_spec,
        compiler_params=pltpu.CompilerParams(
            dimension_semantics=("parallel",),
            vmem_limit_bytes=32 * 1024 * 1024,
        ),
    )(u_idx, v_idx, mean_arr, user_tab, item_tab, user_b, item_b)

    return out.reshape(B)


if __name__ == "__main__":
    num_users, num_items, emb_size = 64, 64, 128
    batch = 8
    mean = 3.5

    key = jax.random.PRNGKey(0)
    k_ue, k_ub, k_ie, k_ib, k_u, k_v = jax.random.split(key, 6)

    # Deterministic parameter init matching nn.Module.__init__ distributions.
    user_emb = jax.random.uniform(k_ue, (num_users, emb_size),
                                  jnp.float32, 0.0, 0.005)
    user_bias = jax.random.uniform(k_ub, (num_users, 1),
                                   jnp.float32, -0.01, 0.01)
    item_emb = jax.random.uniform(k_ie, (num_items, emb_size),
                                  jnp.float32, 0.0, 0.005)
    item_bias = jax.random.uniform(k_ib, (num_items, 1),
                                   jnp.float32, -0.01, 0.01)

    u = jax.random.randint(k_u, (batch,), 0, num_users, dtype=jnp.int32)
    v = jax.random.randint(k_v, (batch,), 0, num_items, dtype=jnp.int32)

    out = svd_forward(u, v, user_emb, user_bias, item_emb, item_bias, mean)
    out = jax.block_until_ready(out)

    # Pure-JAX reference check.
    ref = (item_emb[v] * user_emb[u]).sum(1) + user_bias[u, 0] \
          + item_bias[v, 0] + jnp.float32(mean)
    assert out.shape == (batch,)
    assert jnp.allclose(out, ref, atol=1e-5, rtol=1e-5)

    print("KERNEL_OK")
</pallas_src>

<mosaic_0001>
module attributes {stable_mosaic.version = 11 : i64} {
  func.func @svd_kernel(%arg0: i32, %arg1: memref<8xi32, #tpu.memory_space<smem>>, %arg2: memref<8xi32, #tpu.memory_space<smem>>, %arg3: memref<1xf32, #tpu.memory_space<smem>>, %arg4: memref<1x1x128xf32, #tpu.memory_space<vmem>>, %arg5: memref<1x1x128xf32, #tpu.memory_space<vmem>>, %arg6: memref<1x1x1xf32, #tpu.memory_space<vmem>>, %arg7: memref<1x1x1xf32, #tpu.memory_space<vmem>>, %arg8: memref<1x1x1xf32, #tpu.memory_space<vmem>>) attributes {dimension_semantics = [#tpu.dimension_semantics<parallel>], iteration_bounds = array<i64: 8>, scalar_prefetch = 2 : i64, scratch_operands = 0 : i64, tpu.core_type = #tpu.core_type<tc>, window_params = [{transform_indices = @transform_0, window_bounds = array<i64: 1>}, {transform_indices = @transform_1, window_bounds = array<i64: 1, 1, 128>}, {transform_indices = @transform_2, window_bounds = array<i64: 1, 1, 128>}, {transform_indices = @transform_3, window_bounds = array<i64: 1, 1, 1>}, {transform_indices = @transform_4, window_bounds = array<i64: 1, 1, 1>}, {transform_indices = @transform_5, window_bounds = array<i64: 1, 1, 1>}]} {
    %c0 = arith.constant 0 : index
    %c0_0 = arith.constant 0 : index
    %c0_1 = arith.constant 0 : index
    %0 = vector.load %arg4[%c0, %c0_0, %c0_1] : memref<1x1x128xf32, #tpu.memory_space<vmem>>, vector<1x1x128xf32>
    %c0_2 = arith.constant 0 : index
    %c0_3 = arith.constant 0 : index
    %c0_4 = arith.constant 0 : index
    %1 = vector.load %arg5[%c0_2, %c0_3, %c0_4] : memref<1x1x128xf32, #tpu.memory_space<vmem>>, vector<1x1x128xf32>
    %2 = arith.mulf %0, %1 : vector<1x1x128xf32>
    %cst = arith.constant dense<0.000000e+00> : vector<1x1xf32>
    %3 = vector.multi_reduction <add>, %2, %cst [2] : vector<1x1x128xf32> to vector<1x1xf32>
    %4 = vector.shape_cast %3 : vector<1x1xf32> to vector<1x1x1xf32>
    %c0_5 = arith.constant 0 : index
    %c0_6 = arith.constant 0 : index
    %c0_7 = arith.constant 0 : index
    %5 = vector.load %arg6[%c0_5, %c0_6, %c0_7] : memref<1x1x1xf32, #tpu.memory_space<vmem>>, vector<1x1x1xf32>
    %6 = arith.addf %4, %5 : vector<1x1x1xf32>
    %c0_8 = arith.constant 0 : index
    %c0_9 = arith.constant 0 : index
    %c0_10 = arith.constant 0 : index
    %7 = vector.load %arg7[%c0_8, %c0_9, %c0_10] : memref<1x1x1xf32, #tpu.memory_space<vmem>>, vector<1x1x1xf32>
    %8 = arith.addf %6, %7 : vector<1x1x1xf32>
    %c0_11 = arith.constant 0 : index
    %9 = memref.load %arg3[%c0_11] : memref<1xf32, #tpu.memory_space<smem>>
    %10 = vector.broadcast %9 : f32 to vector<1x1x1xf32>
    %11 = arith.addf %8, %10 : vector<1x1x1xf32>
    %c0_12 = arith.constant 0 : index
    %c0_13 = arith.constant 0 : index
    %c0_14 = arith.constant 0 : index
    %12 = vector.load %arg8[%c0_12, %c0_13, %c0_14] : memref<1x1x1xf32, #tpu.memory_space<vmem>>, vector<1x1x1xf32>
    tpu.vector_store %arg8[%c0_12, %c0_13, %c0_14], %11 {strides = array<i32>} : memref<1x1x1xf32, #tpu.memory_space<vmem>>, vector<1x1x1xf32>,
    return
  }
  func.func @transform_0(%arg0: i32, %arg1: memref<8xi32, #tpu.memory_space<smem>>, %arg2: memref<8xi32, #tpu.memory_space<smem>>) -> i32 {
    %c0_i32 = arith.constant 0 : i32
    %c0_i32_0 = arith.constant 0 : i32
    return %c0_i32 : i32
  }
  func.func @transform_1(%arg0: i32, %arg1: memref<8xi32, #tpu.memory_space<smem>>, %arg2: memref<8xi32, #tpu.memory_space<smem>>) -> (i32, i32, i32) {
    %0 = arith.index_cast %arg0 : i32 to index
    %1 = memref.load %arg1[%0] : memref<8xi32, #tpu.memory_space<smem>>
    %c0_i32 = arith.constant 0 : i32
    %c0_i32_0 = arith.constant 0 : i32
    %c0_i32_1 = arith.constant 0 : i32
    return %1, %c0_i32, %c0_i32_0 : i32, i32, i32
  }
  func.func @transform_2(%arg0: i32, %arg1: memref<8xi32, #tpu.memory_space<smem>>, %arg2: memref<8xi32, #tpu.memory_space<smem>>) -> (i32, i32, i32) {
    %0 = arith.index_cast %arg0 : i32 to index
    %1 = memref.load %arg2[%0] : memref<8xi32, #tpu.memory_space<smem>>
    %c0_i32 = arith.constant 0 : i32
    %c0_i32_0 = arith.constant 0 : i32
    %c0_i32_1 = arith.constant 0 : i32
    return %1, %c0_i32, %c0_i32_0 : i32, i32, i32
  }
  func.func @transform_3(%arg0: i32, %arg1: memref<8xi32, #tpu.memory_space<smem>>, %arg2: memref<8xi32, #tpu.memory_space<smem>>) -> (i32, i32, i32) {
    %0 = arith.index_cast %arg0 : i32 to index
    %1 = memref.load %arg1[%0] : memref<8xi32, #tpu.memory_space<smem>>
    %c0_i32 = arith.constant 0 : i32
    %c0_i32_0 = arith.constant 0 : i32
    %c0_i32_1 = arith.constant 0 : i32
    return %1, %c0_i32, %c0_i32_0 : i32, i32, i32
  }
  func.func @transform_4(%arg0: i32, %arg1: memref<8xi32, #tpu.memory_space<smem>>, %arg2: memref<8xi32, #tpu.memory_space<smem>>) -> (i32, i32, i32) {
    %0 = arith.index_cast %arg0 : i32 to index
    %1 = memref.load %arg2[%0] : memref<8xi32, #tpu.memory_space<smem>>
    %c0_i32 = arith.constant 0 : i32
    %c0_i32_0 = arith.constant 0 : i32
    %c0_i32_1 = arith.constant 0 : i32
    return %1, %c0_i32, %c0_i32_0 : i32, i32, i32
  }
  func.func @transform_5(%arg0: i32, %arg1: memref<8xi32, #tpu.memory_space<smem>>, %arg2: memref<8xi32, #tpu.memory_space<smem>>) -> (i32, i32, i32) {
    %c0_i32 = arith.constant 0 : i32
    %c0_i32_0 = arith.constant 0 : i32
    %c0_i32_1 = arith.constant 0 : i32
    return %arg0, %c0_i32, %c0_i32_0 : i32, i32, i32
  }
}

</mosaic_0001>

<llo_original>
// kernel: tpu_custom_call.1
$region0: #{tpu_custom_call.1}
  #allocation0 [shape = 'u32[]', space=smem, size = 0x4, offset = 0x4, fixed_abs, tag = 'smem constant byte address 0x4 - core index']
  #allocation1 [shape = 'u32[144,128]{1,0:T(1,128)}', space=vmem, size = 0x12000, scoped, tag = 'internal scratch']
  #allocation2 [shape = 's32[1]{0}', space=sflag, size = 0x4, scoped, tag = 'scoped memory for tpu_custom_call.1']
  #allocation3 [shape = 'u8[512]{0}', space=smem, size = 0x200, scoped, tag = 'prefetched SMEM operand 0']
  #allocation4 [shape = 'u8[512]{0}', space=smem, size = 0x200, scoped, tag = 'prefetched SMEM operand 1']
  #allocation5 [shape = 'f32[1]{0:T(128)S(6)}', space=smem, size = 0x200, scoped, tag = 'scoped memory for tpu_custom_call.1']
  %s0 = inlined_call_operand.vmem [shape: s32[8], index: 0, kind: input, shape index: {}]
  %s1 = inlined_call_operand.vmem [shape: s32[8], index: 1, kind: input, shape index: {}]
  %s2 = inlined_call_operand.<no memory space> [shape: f32[1], index: 2, kind: input, shape index: {}]
  %s3 = inlined_call_operand.vmem [shape: f32[64,1,128], index: 3, kind: input, shape index: {}]
  %s4 = inlined_call_operand.vmem [shape: f32[64,1,128], index: 4, kind: input, shape index: {}]
  %s5 = inlined_call_operand.vmem [shape: f32[64,1,1], index: 5, kind: input, shape index: {}]
  %s6 = inlined_call_operand.vmem [shape: f32[64,1,1], index: 6, kind: input, shape index: {}]
  %s7 = inlined_call_operand.vmem [shape: f32[8,1,1], index: 7, kind: output, shape index: {}]
  %s8 = sld [smem:[#allocation0]]
  $region53: #{tpu_custom_call.1} parent=0
    _
  %s10 = ssub.s32 1, %s8
  %s11 = scalar_select 0, %s10, %s8
  %s12 = sshll.u32 %s0, 4
  %s13 = int_to_ptr.vmem [resolvable:$true] %s12
  %15 = dma.vmem_to_smem %s13, 16, [#allocation3], [#allocation2]
  %s16 = sshll.u32 %s1, 4
  %s17 = int_to_ptr.vmem [resolvable:$true] %s16
  %19 = dma.vmem_to_smem %s17, 16, [#allocation4], [#allocation2]
  %20 = sst [smem:[#allocation5]] %s2
  %21 = dma.done [#allocation2], 32
  %22 = sfence
  loop: start=0, step=1, limit=10
  $region2: #{tpu_custom_call.1} parent=0 // loop_pre_header
    _
  $region3: #{tpu_custom_call.1} parent=0 // loop_header
    %s24 = sphi 0, %s28
    %p25 = scmp.ge.s32.totalorder %s24, 10
    %s32 = sphi 0, %s32
    %s34 = sphi 0, %s32
    %s35 = sphi 0, %s34
    %s49 = sphi 0, %s35
    %s57 = sphi 0, %s59
    %s60 = sphi 0, %s57
    %s61 = sphi 0, %s60
    %s77 = sphi 0, %s61
    %s85 = sphi 0, %s87
    %s88 = sphi 0, %s85
    %s89 = sphi 0, %s88
    %s105 = sphi 0, %s89
    %s113 = sphi 0, %s115
    %s116 = sphi 0, %s113
    %s117 = sphi 0, %s116
    %s133 = sphi 0, %s117
    %s141 = sphi 0, %s143
    %s144 = sphi 0, %s141
    %s145 = sphi 0, %s144
    %s161 = sphi 0, %s145
    %s167 = sphi 0, %s169
    %s170 = sphi 0, %s167
    %s171 = sphi 0, %s170
    %s187 = sphi 0, %s171
  $region4: #{tpu_custom_call.1} parent=0 // loop_header_branch
    %27 = sbr.rel (%p25) target = $region8
  $region5: #{tpu_custom_call.1} parent=0 // loop_body
    %s29 = ssub.s32 %s24, 1
    %s30 = ssub.s32 %s24, 2
    %s31 = sadd.s32 %s24, 1
    %s33 = sadd.s32 %s32, 1
    %p36 = scmp.eq.s32.totalorder %s24, 7
    %p37 = scmp.ne.s32.totalorder %s32, %s34
    %p38 = scmp.eq.s32.totalorder %s24, 0
    %p39 = por %p37, %p38
    %p40 = scmp.ne.s32.totalorder %s32, %s34
    %p41 = scmp.eq.s32.totalorder %s29, 7
    %p42 = por %p40, %p41
    %p43 = scmp.ne.s32.totalorder %s34, %s35
    %p44 = scmp.eq.s32.totalorder %s29, 0
    %p45 = por %p43, %p44
    %p46 = scmp.ne.s32.totalorder %s34, %s35
    %p47 = scmp.eq.s32.totalorder %s30, 7
    %p48 = por %p46, %p47
    %p50 = scmp.ne.s32.totalorder %s35, %s49
    %p51 = scmp.eq.s32.totalorder %s30, 0
    %p52 = por %p50, %p51
    %s53 = sld [smem:[#allocation3 + %s24]]
    %s54 = sld [smem:[#allocation3 + %s31]]
    %s55 = ssub.s32 %s53, %s54
    %p56 = scmp.eq.s32.totalorder %s55, 0
    %s58 = sadd.s32 %s57, 1
    %s59 = scalar_select %p56, %s57, %s58
    %p62 = pneg %p56
    %p63 = scmp.eq.s32.totalorder %s24, 7
    %p64 = por %p62, %p63
    %p65 = scmp.ne.s32.totalorder %s57, %s60
    %p66 = scmp.eq.s32.totalorder %s24, 0
    %p67 = por %p65, %p66
    %p68 = scmp.ne.s32.totalorder %s57, %s60
    %p69 = scmp.eq.s32.totalorder %s29, 7
    %p70 = por %p68, %p69
    %p71 = scmp.ne.s32.totalorder %s60, %s61
    %p72 = scmp.eq.s32.totalorder %s29, 0
    %p73 = por %p71, %p72
    %p74 = scmp.ne.s32.totalorder %s60, %s61
    %p75 = scmp.eq.s32.totalorder %s30, 7
    %p76 = por %p74, %p75
    %p78 = scmp.ne.s32.totalorder %s61, %s77
    %p79 = scmp.eq.s32.totalorder %s30, 0
    %p80 = por %p78, %p79
    %s81 = sld [smem:[#allocation4 + %s24]]
    %s82 = sld [smem:[#allocation4 + %s31]]
    %s83 = ssub.s32 %s81, %s82
    %p84 = scmp.eq.s32.totalorder %s83, 0
    %s86 = sadd.s32 %s85, 1
    %s87 = scalar_select %p84, %s85, %s86
    %p90 = pneg %p84
    %p91 = scmp.eq.s32.totalorder %s24, 7
    %p92 = por %p90, %p91
    %p93 = scmp.ne.s32.totalorder %s85, %s88
    %p94 = scmp.eq.s32.totalorder %s24, 0
    %p95 = por %p93, %p94
    %p96 = scmp.ne.s32.totalorder %s85, %s88
    %p97 = scmp.eq.s32.totalorder %s29, 7
    %p98 = por %p96, %p97
    %p99 = scmp.ne.s32.totalorder %s88, %s89
    %p100 = scmp.eq.s32.totalorder %s29, 0
    %p101 = por %p99, %p100
    %p102 = scmp.ne.s32.totalorder %s88, %s89
    %p103 = scmp.eq.s32.totalorder %s30, 7
    %p104 = por %p102, %p103
    %p106 = scmp.ne.s32.totalorder %s89, %s105
    %p107 = scmp.eq.s32.totalorder %s30, 0
    %p108 = por %p106, %p107
    %s109 = sld [smem:[#allocation3 + %s24]]
    %s110 = sld [smem:[#allocation3 + %s31]]
    %s111 = ssub.s32 %s109, %s110
    %p112 = scmp.eq.s32.totalorder %s111, 0
    %s114 = sadd.s32 %s113, 1
    %s115 = scalar_select %p112, %s113, %s114
    %p118 = pneg %p112
    %p119 = scmp.eq.s32.totalorder %s24, 7
    %p120 = por %p118, %p119
    %p121 = scmp.ne.s32.totalorder %s113, %s116
    %p122 = scmp.eq.s32.totalorder %s24, 0
    %p123 = por %p121, %p122
    %p124 = scmp.ne.s32.totalorder %s113, %s116
    %p125 = scmp.eq.s32.totalorder %s29, 7
    %p126 = por %p124, %p125
    %p127 = scmp.ne.s32.totalorder %s116, %s117
    %p128 = scmp.eq.s32.totalorder %s29, 0
    %p129 = por %p127, %p128
    %p130 = scmp.ne.s32.totalorder %s116, %s117
    %p131 = scmp.eq.s32.totalorder %s30, 7
    %p132 = por %p130, %p131
    %p134 = scmp.ne.s32.totalorder %s117, %s133
    %p135 = scmp.eq.s32.totalorder %s30, 0
    %p136 = por %p134, %p135
    %s137 = sld [smem:[#allocation4 + %s24]]
    %s138 = sld [smem:[#allocation4 + %s31]]
    %s139 = ssub.s32 %s137, %s138
    %p140 = scmp.eq.s32.totalorder %s139, 0
    %s142 = sadd.s32 %s141, 1
    %s143 = scalar_select %p140, %s141, %s142
    %p146 = pneg %p140
    %p147 = scmp.eq.s32.totalorder %s24, 7
    %p148 = por %p146, %p147
    %p149 = scmp.ne.s32.totalorder %s141, %s144
    %p150 = scmp.eq.s32.totalorder %s24, 0
    %p151 = por %p149, %p150
    %p152 = scmp.ne.s32.totalorder %s141, %s144
    %p153 = scmp.eq.s32.totalorder %s29, 7
    %p154 = por %p152, %p153
    %p155 = scmp.ne.s32.totalorder %s144, %s145
    %p156 = scmp.eq.s32.totalorder %s29, 0
    %p157 = por %p155, %p156
    %p158 = scmp.ne.s32.totalorder %s144, %s145
    %p159 = scmp.eq.s32.totalorder %s30, 7
    %p160 = por %p158, %p159
    %p162 = scmp.ne.s32.totalorder %s145, %s161
    %p163 = scmp.eq.s32.totalorder %s30, 0
    %p164 = por %p162, %p163
    %s165 = ssub.s32 %s24, %s31
    %p166 = scmp.eq.s32.totalorder %s165, 0
    %s168 = sadd.s32 %s167, 1
    %s169 = scalar_select %p166, %s167, %s168
    %p172 = pneg %p166
    %p173 = scmp.eq.s32.totalorder %s24, 7
    %p174 = por %p172, %p173
    %p175 = scmp.ne.s32.totalorder %s167, %s170
    %p176 = scmp.eq.s32.totalorder %s24, 0
    %p177 = por %p175, %p176
    %p178 = scmp.ne.s32.totalorder %s167, %s170
    %p179 = scmp.eq.s32.totalorder %s29, 7
    %p180 = por %p178, %p179
    %p181 = scmp.ne.s32.totalorder %s170, %s171
    %p182 = scmp.eq.s32.totalorder %s29, 0
    %p183 = por %p181, %p182
    %p184 = scmp.ne.s32.totalorder %s170, %s171
    %p185 = scmp.eq.s32.totalorder %s30, 7
    %p186 = por %p184, %p185
    %p188 = scmp.ne.s32.totalorder %s171, %s187
    %p189 = scmp.eq.s32.totalorder %s30, 0
    %p190 = por %p188, %p189
    %p191 = scmp.le.s32.totalorder 1, %s24
    %p192 = scmp.lt.s32.totalorder %s24, 9
    %p193 = pnand %p191, %p192
    %p194 = pneg %p193
    // Predicated region
    $region9: #{tpu_custom_call.1} parent=5 // pred_check
      _
    $region10: #{tpu_custom_call.1} parent=5 // pred_check_branch
      %196 = sbr.rel (%p193) target = $region12
    $region11: #{tpu_custom_call.1} parent=5 // pred_region
      %s197 = ssub.s32 %s24, 1
      // Predicated region
      $region13: #{tpu_custom_call.1} parent=11 // pred_check
        %p198 = pneg %p45
      $region14: #{tpu_custom_call.1} parent=11 // pred_check_branch
        %200 = sbr.rel (%p198) target = $region16
      $region15: #{tpu_custom_call.1} parent=11 // pred_region
        _
      $region16: #{tpu_custom_call.1} parent=11 // pred_fallthru
        _
    $region12: #{tpu_custom_call.1} parent=5 // pred_fallthru
      _
    %p201 = scmp.lt.s32.totalorder %s24, 8
    // Predicated region
    $region17: #{tpu_custom_call.1} parent=5 // pred_check
      %p202 = pneg %p201
    $region18: #{tpu_custom_call.1} parent=5 // pred_check_branch
      %204 = sbr.rel (%p202) target = $region20
    $region19: #{tpu_custom_call.1} parent=5 // pred_region
      // Predicated region
      $region21: #{tpu_custom_call.1} parent=19 // pred_check
        %p205 = pneg %p67
      $region22: #{tpu_custom_call.1} parent=19 // pred_check_branch
        %207 = sbr.rel (%p205) target = $region24
      $region23: #{tpu_custom_call.1} parent=19 // pred_region
        %s208 = sld [smem:[#allocation3 + %s24]]
        %p209 = scmp.lt.s32.totalorder %s208, 63
        %s210 = scalar_select %p209, %s208, 63
        %s211 = scalar_lea.vmem %s3, %s210
        %s212 = sld [smem:[#allocation3 + %s24]]
      $region24: #{tpu_custom_call.1} parent=19 // pred_fallthru
        _
      // Predicated region
      $region25: #{tpu_custom_call.1} parent=19 // pred_check
        %p213 = pneg %p95
      $region26: #{tpu_custom_call.1} parent=19 // pred_check_branch
        %215 = sbr.rel (%p213) target = $region28
      $region27: #{tpu_custom_call.1} parent=19 // pred_region
        %s216 = sld [smem:[#allocation4 + %s24]]
        %p217 = scmp.lt.s32.totalorder %s216, 63
        %s218 = scalar_select %p217, %s216, 63
        %s219 = scalar_lea.vmem %s4, %s218
        %s220 = sld [smem:[#allocation4 + %s24]]
      $region28: #{tpu_custom_call.1} parent=19 // pred_fallthru
        _
      // Predicated region
      $region29: #{tpu_custom_call.1} parent=19 // pred_check
        %p221 = pneg %p123
      $region30: #{tpu_custom_call.1} parent=19 // pred_check_branch
        %223 = sbr.rel (%p221) target = $region32
      $region31: #{tpu_custom_call.1} parent=19 // pred_region
        %s224 = sld [smem:[#allocation3 + %s24]]
        %p225 = scmp.lt.s32.totalorder %s224, 63
        %s226 = scalar_select %p225, %s224, 63
        %s227 = scalar_lea.vmem %s5, %s226
        %s228 = sld [smem:[#allocation3 + %s24]]
      $region32: #{tpu_custom_call.1} parent=19 // pred_fallthru
        _
      // Predicated region
      $region33: #{tpu_custom_call.1} parent=19 // pred_check
        %p229 = pneg %p151
      $region34: #{tpu_custom_call.1} parent=19 // pred_check_branch
        %231 = sbr.rel (%p229) target = $region36
      $region35: #{tpu_custom_call.1} parent=19 // pred_region
        %s232 = sld [smem:[#allocation4 + %s24]]
        %p233 = scmp.lt.s32.totalorder %s232, 63
        %s234 = scalar_select %p233, %s232, 63
        %s235 = scalar_lea.vmem %s6, %s234
        %s236 = sld [smem:[#allocation4 + %s24]]
      $region36: #{tpu_custom_call.1} parent=19 // pred_fallthru
        _
    $region20: #{tpu_custom_call.1} parent=5 // pred_fallthru
      _
    %p237 = scmp.le.s32.totalorder 1, %s24
    %p238 = scmp.lt.s32.totalorder %s24, 9
    %p239 = pnand %p237, %p238
    %p240 = pneg %p239
    // Predicated region
    $region37: #{tpu_custom_call.1} parent=5 // pred_check
      _
    $region38: #{tpu_custom_call.1} parent=5 // pred_check_branch
      %242 = sbr.rel (%p239) target = $region40
    $region39: #{tpu_custom_call.1} parent=5 // pred_region
      %s243 = ssub.s32 %s24, 1
      %p244 = pneg %p45
      %p245 = pneg %p42
      %s246 = sld [smem:[#allocation3 + %s29]]
      %p247 = scmp.lt.s32.totalorder %s246, 63
      %s248 = scalar_select %p247, %s246, 63
      %s249 = scalar_lea.vmem %s3, %s248
      %p250 = pneg %p73
      %p251 = pneg %p70
      %s252 = sld [smem:[#allocation4 + %s29]]
      %p253 = scmp.lt.s32.totalorder %s252, 63
      %s254 = scalar_select %p253, %s252, 63
      %s255 = scalar_lea.vmem %s4, %s254
      %p256 = pneg %p101
      %p257 = pneg %p98
      %s258 = sld [smem:[#allocation3 + %s29]]
      %p259 = scmp.lt.s32.totalorder %s258, 63
      %s260 = scalar_select %p259, %s258, 63
      %s261 = scalar_lea.vmem %s5, %s260
      %p262 = pneg %p129
      %p263 = pneg %p126
      %s264 = sld [smem:[#allocation4 + %s29]]
      %p265 = scmp.lt.s32.totalorder %s264, 63
      %s266 = scalar_select %p265, %s264, 63
      %s267 = scalar_lea.vmem %s6, %s266
      %p268 = pneg %p157
      %p269 = pneg %p154
      %p270 = pneg %p183
      %p271 = pneg %p180
      %p272 = scmp.lt.s32.totalorder %s29, 7
      %s273 = scalar_select %p272, %s29, 7
      %s274 = scalar_lea.vmem %s7, %s273
      %s275 = sld [smem:[#allocation3 + %s29]]
      %p276 = scmp.lt.s32.totalorder %s275, 63
      %s277 = scalar_select %p276, %s275, 63
      %s278 = scalar_lea.vmem %s3, %s277
      %s279 = sld [smem:[#allocation3 + %s29]]
      %s280 = sld [smem:[#allocation4 + %s29]]
      %p281 = scmp.lt.s32.totalorder %s280, 63
      %s282 = scalar_select %p281, %s280, 63
      %s283 = scalar_lea.vmem %s4, %s282
      %s284 = sld [smem:[#allocation4 + %s29]]
      %s285 = sld [smem:[#allocation3 + %s29]]
      %p286 = scmp.lt.s32.totalorder %s285, 63
      %s287 = scalar_select %p286, %s285, 63
      %s288 = scalar_lea.vmem %s5, %s287
      %s289 = sld [smem:[#allocation3 + %s29]]
      %s290 = sld [smem:[#allocation4 + %s29]]
      %p291 = scmp.lt.s32.totalorder %s290, 63
      %s292 = scalar_select %p291, %s290, 63
      %s293 = scalar_lea.vmem %s6, %s292
      %s294 = sld [smem:[#allocation4 + %s29]]
      %p295 = scmp.lt.s32.totalorder %s29, 7
      %s296 = scalar_select %p295, %s29, 7
      %s297 = scalar_lea.vmem %s7, %s296
      %v298 = vld [vmem:[%s278] sm:$0x1]
      %v299 = vld [vmem:[%s283] sm:$0x1]
      %v300 = vmul.f32 %v298, %v299
      %vm301 = vcmask 1040384
      %v302 = vsel %vm301, %v300, 0.0
      %303 = vadd.xlane.f32.xlu0 %v302
      %v304 = vpop.xlane.xlu0 %303
      %v305 = vld [vmem:[%s288] sm:$0x1]
      %v306 = vadd.f32 %v304, %v305
      %v307 = vld [vmem:[%s293] sm:$0x1]
      %v308 = vadd.f32 %v306, %v307
      %s309 = sld [smem:[#allocation5]]
      %v310 = vstv %s309
      %v311 = vadd.f32 %v308, %v310
      %vm312 = vcmask 0
      %313 = vst.msk [vmem:[%s297] sm:$0x1] %vm312, %v311
      %p314 = scmp.lt.s32.totalorder %s29, 7
      %s315 = scalar_select %p314, %s29, 7
      %s316 = scalar_lea.vmem %s7, %s315
      // Predicated region
      $region41: #{tpu_custom_call.1} parent=39 // pred_check
        %p317 = pneg %p180
      $region42: #{tpu_custom_call.1} parent=39 // pred_check_branch
        %319 = sbr.rel (%p317) target = $region44
      $region43: #{tpu_custom_call.1} parent=39 // pred_region
        _
      $region44: #{tpu_custom_call.1} parent=39 // pred_fallthru
        _
    $region40: #{tpu_custom_call.1} parent=5 // pred_fallthru
      _
    %p320 = scmp.le.s32.totalorder 2, %s24
    // Predicated region
    $region45: #{tpu_custom_call.1} parent=5 // pred_check
      %p321 = pneg %p320
    $region46: #{tpu_custom_call.1} parent=5 // pred_check_branch
      %323 = sbr.rel (%p321) target = $region48
    $region47: #{tpu_custom_call.1} parent=5 // pred_region
      %s324 = ssub.s32 %s24, 2
      // Predicated region
      $region49: #{tpu_custom_call.1} parent=47 // pred_check
        %p325 = pneg %p186
      $region50: #{tpu_custom_call.1} parent=47 // pred_check_branch
        %327 = sbr.rel (%p325) target = $region52
      $region51: #{tpu_custom_call.1} parent=47 // pred_region
        %p328 = scmp.lt.s32.totalorder %s30, 7
        %s329 = scalar_select %p328, %s30, 7
        %s330 = scalar_lea.vmem %s7, %s329
      $region52: #{tpu_custom_call.1} parent=47 // pred_fallthru
        _
    $region48: #{tpu_custom_call.1} parent=5 // pred_fallthru
      _
  $region6: #{tpu_custom_call.1} parent=0 // loop_footer
    %s28 = sadd.s32 1, %s24
  $region7: #{tpu_custom_call.1} parent=0 // loop_footer_branch
    %23 = sbr.rel target = $region3
  $region8: #{tpu_custom_call.1} parent=0 // loop_exit
    _

</llo_original>
